<compile_context>
chip_gen: v7x
topology: tpu7x:2x2x1
jax: 0.10.0
libtpu: 0.0.40
codegen_flags: <defaults>
</compile_context>

<pallas_src>
import functools

import jax
import jax.numpy as jnp
from jax.experimental import pallas as pl
from jax.experimental.pallas import tpu as pltpu

NEG_SLOPE = 0.1   # nn.LeakyReLU(0.1)
LN_EPS = 1e-5     # nn.LayerNorm default eps
HID = 128         # hidden width of the feature layer / fused head
TB_MAX = 1024     # max batch-tile rows per grid step


def _leaky_relu(h):
    return jnp.where(h > 0, h, NEG_SLOPE * h)


def _layer_norm_fast(h, gamma, beta):
    # single-pass stats: mean and mean-of-squares are independent reductions
    # (better XLU interleave); biased variance, matching PyTorch LayerNorm.
    mu = jnp.mean(h, axis=-1, keepdims=True)
    ms = jnp.mean(h * h, axis=-1, keepdims=True)
    var = jnp.maximum(ms - mu * mu, 0.0)          # clamp tiny negative rounding
    return (h - mu) * jax.lax.rsqrt(var + LN_EPS) * gamma + beta


def dqn_kernel(x_ref, w1_ref, w2_ref, wh1_ref, wh2_ref, p_ref, out_ref, *, out_size):
    # packed small-param slab: rows = [b1, g1, be1, b2, g2, be2, b_head1, b_head2]
    p = p_ref[...]
    b1, g1, be1 = p[0:1, :], p[1:2, :], p[2:3, :]
    b2, g2, be2 = p[3:4, :], p[4:5, :], p[5:6, :]
    bh1, bh2 = p[6:7, :], p[7:8, :]

    def mm(a, w_ref):
        # bf16 MXU matmul with f32 accumulation.
        return jnp.dot(a.astype(jnp.bfloat16), w_ref[...],
                       preferred_element_type=jnp.float32)

    # feature_layer: Linear -> LeakyReLU -> LayerNorm (x2), elementwise math in f32
    h1 = _layer_norm_fast(_leaky_relu(mm(x_ref[...], w1_ref) + b1), g1, be1)
    feat = _layer_norm_fast(_leaky_relu(mm(h1, w2_ref) + b2), g2, be2)

    # fused value/advantage head: one (128,128) dot for [v_h | a_h], one packed
    # (128,128) dot producing adv in lanes [0, out_size) and value in lane 127.
    hh = _leaky_relu(mm(feat, wh1_ref) + bh1)
    head = mm(hh, wh2_ref) + bh2                       # (tb, 128) f32

    value = head[:, HID - 1:HID]                       # lane 127 holds V(s)
    # Lanes [out_size, 126] of head are EXACTLY zero by construction of
    # wh2/bh2 (see pack_params), so sum(head) - value equals the sum over the
    # true out_size advantage lanes -- no iota/mask needed.
    adv_mean = (jnp.sum(head, axis=-1, keepdims=True) - value) * (1.0 / out_size)

    # lane-dense write; only lanes [0, out_size) are meaningful (sliced in wrapper)
    out_ref[...] = (value + head - adv_mean).astype(out_ref.dtype)


def pack_params(p, out_size):
    """Build the fused/packed tensors the kernel consumes."""
    # fused first head weight: [wv1 | wa1]  -> (128, 128) bf16
    wh1 = jnp.concatenate([p["wv1"], p["wa1"]], axis=1)

    # packed second head weight: adv cols [0, out_size), value col 127,
    # zeros elsewhere.  NOTE: the kernel's `sum(head) - value` advantage-mean
    # shortcut REQUIRES columns [out_size, 126] of wh2 and bh2 to be exactly
    # zero -- keep this construction zero-initialized.
    wh2 = jnp.zeros((HID, HID), p["wv2"].dtype)
    wh2 = wh2.at[:64, HID - 1:HID].set(p["wv2"])       # rows 0..63  <- v_h path
    wh2 = wh2.at[64:, :out_size].set(p["wa2"])         # rows 64..127 <- a_h path

    bh1 = jnp.concatenate([p["bv1"], p["ba1"]], axis=1)            # (1, 128) f32
    bh2 = jnp.zeros((1, HID), jnp.float32)
    bh2 = bh2.at[:, :out_size].set(p["ba2"])
    bh2 = bh2.at[:, HID - 1:HID].set(p["bv2"])

    # single (8, 128) f32 slab for all small params (exactly one VMEM tile)
    pvec = jnp.concatenate(
        [p["b1"], p["g1"], p["be1"], p["b2"], p["g2"], p["be2"], bh1, bh2], axis=0)

    return p["w1"], p["w2"], wh1, wh2, pvec


def _round_up(n, m):
    return ((n + m - 1) // m) * m


def enhanced_dqn_forward(x, params, out_size, out_dtype=jnp.float32):
    assert out_size <= HID - 1, "out_size must leave lane 127 free for the value column"
    batch, in_size = x.shape
    w1, w2, wh1, wh2, pvec = pack_params(params, out_size)

    # Batch tiling: at least 2 grid steps when the batch allows it (so the
    # "parallel" batch axis can shard across v7x's two TensorCores), capped at
    # TB_MAX rows/step so per-grid-step (~0.35us) overhead is amortized on
    # large batches.  Weights stay VMEM-resident (index_map -> (0, 0)).
    min_rows = _round_up(batch, 8)
    tb = max(8, min(TB_MAX, _round_up(pl.cdiv(min_rows, 2), 8)))
    padded = _round_up(batch, tb)

    x = x.astype(jnp.bfloat16)                  # halve x DMA; MXU eats bf16 anyway
    if padded != batch:
        x = jnp.pad(x, ((0, padded - batch), (0, 0)))
    grid = (padded // tb,)

    kernel = functools.partial(dqn_kernel, out_size=out_size)
    out = pl.pallas_call(
        kernel,
        out_shape=jax.ShapeDtypeStruct((padded, HID), out_dtype),
        grid_spec=pltpu.PrefetchScalarGridSpec(
            num_scalar_prefetch=0,
            grid=grid,
            in_specs=[
                pl.BlockSpec((tb, in_size), lambda i: (i, 0)),     # x (batch-tiled)
                pl.BlockSpec((in_size, HID), lambda i: (0, 0)),    # w1 (resident)
                pl.BlockSpec((HID, HID), lambda i: (0, 0)),        # w2
                pl.BlockSpec((HID, HID), lambda i: (0, 0)),        # fused head1 weight
                pl.BlockSpec((HID, HID), lambda i: (0, 0)),        # packed head2 weight
                pl.BlockSpec((8, HID), lambda i: (0, 0)),          # packed small params
            ],
            out_specs=pl.BlockSpec((tb, HID), lambda i: (i, 0)),
        ),
        compiler_params=pltpu.CompilerParams(
            dimension_semantics=("parallel",),
            # explicit scoped-VMEM: keeps tb up to TB_MAX safe under v5e's
            # 16 MiB default; well within physical VMEM on all generations.
            vmem_limit_bytes=32 * 1024 * 1024),
    )(x, w1, w2, wh1, wh2, pvec)

    return out[:batch, :out_size]


def init_params(key, input_size, output_size):
    """PyTorch-Linear-style uniform(-1/sqrt(fan_in), 1/sqrt(fan_in)); weights bf16."""
    def lin(key, fan_in, fan_out):
        kw, kb = jax.random.split(key)
        bound = 1.0 / jnp.sqrt(fan_in)
        w = jax.random.uniform(kw, (fan_in, fan_out), jnp.float32, -bound, bound)
        b = jax.random.uniform(kb, (1, fan_out), jnp.float32, -bound, bound)
        return w.astype(jnp.bfloat16), b

    keys = jax.random.split(key, 6)
    w1, b1 = lin(keys[0], input_size, HID)
    w2, b2 = lin(keys[1], HID, HID)
    wv1, bv1 = lin(keys[2], HID, 64)
    wv2, bv2 = lin(keys[3], 64, 1)
    wa1, ba1 = lin(keys[4], HID, 64)
    wa2, ba2 = lin(keys[5], 64, output_size)
    ones = jnp.ones((1, HID), jnp.float32)
    zeros = jnp.zeros((1, HID), jnp.float32)
    return dict(
        w1=w1, b1=b1, g1=ones, be1=zeros,
        w2=w2, b2=b2, g2=ones, be2=zeros,
        wv1=wv1, bv1=bv1, wv2=wv2, bv2=bv2,
        wa1=wa1, ba1=ba1, wa2=wa2, ba2=ba2,
    )


def reference_forward(x, p):
    """Pure-JAX reference (same bf16-weight / f32-accumulate recipe, textbook
    two-pass LayerNorm so the kernel's single-pass LN is actually verified)."""
    def mm(a, w):
        return jnp.dot(a.astype(jnp.bfloat16), w, preferred_element_type=jnp.float32)

    def ln(h, gamma, beta):
        mu = jnp.mean(h, axis=-1, keepdims=True)
        var = jnp.mean((h - mu) * (h - mu), axis=-1, keepdims=True)
        return (h - mu) * jax.lax.rsqrt(var + LN_EPS) * gamma + beta

    h1 = ln(_leaky_relu(mm(x, p["w1"]) + p["b1"]), p["g1"], p["be1"])
    feat = ln(_leaky_relu(mm(h1, p["w2"]) + p["b2"]), p["g2"], p["be2"])
    value = mm(_leaky_relu(mm(feat, p["wv1"]) + p["bv1"]), p["wv2"]) + p["bv2"]
    adv = mm(_leaky_relu(mm(feat, p["wa1"]) + p["ba1"]), p["wa2"]) + p["ba2"]
    return value + (adv - jnp.mean(adv, axis=-1, keepdims=True))


if __name__ == "__main__":
    INPUT_SIZE = 16   # observation dim (radar distances + speed features)
    OUTPUT_SIZE = 3   # number of discrete actions
    BATCH = 8

    key = jax.random.PRNGKey(0)
    kx, kp = jax.random.split(key)
    x = jax.random.normal(kx, (BATCH, INPUT_SIZE), jnp.float32)
    params = init_params(kp, INPUT_SIZE, OUTPUT_SIZE)

    out = enhanced_dqn_forward(x, params, OUTPUT_SIZE)
    out = jax.block_until_ready(out)

    ref = reference_forward(x, params)
    assert out.shape == (BATCH, OUTPUT_SIZE)
    assert jnp.allclose(out, ref, atol=2e-3, rtol=2e-3), (
        float(jnp.max(jnp.abs(out - ref))))

    print("KERNEL_OK")
</pallas_src>

<mosaic_0001>
module attributes {stable_mosaic.version = 11 : i64} {
  func.func @dqn_kernel(%arg0: i32, %arg1: memref<8x16xbf16, #tpu.memory_space<vmem>>, %arg2: memref<16x128xbf16, #tpu.memory_space<vmem>>, %arg3: memref<128x128xbf16, #tpu.memory_space<vmem>>, %arg4: memref<128x128xbf16, #tpu.memory_space<vmem>>, %arg5: memref<128x128xbf16, #tpu.memory_space<vmem>>, %arg6: memref<8x128xf32, #tpu.memory_space<vmem>>, %arg7: memref<8x128xf32, #tpu.memory_space<vmem>>) attributes {dimension_semantics = [#tpu.dimension_semantics<parallel>], iteration_bounds = array<i64: 1>, scalar_prefetch = 0 : i64, scratch_operands = 0 : i64, tpu.core_type = #tpu.core_type<tc>, window_params = [{transform_indices = @transform_0, window_bounds = array<i64: 8, 16>}, {pipeline_mode = #tpu.pipeline_mode<synchronous>, transform_indices = @transform_1, window_bounds = array<i64: 16, 128>}, {pipeline_mode = #tpu.pipeline_mode<synchronous>, transform_indices = @transform_2, window_bounds = array<i64: 128, 128>}, {pipeline_mode = #tpu.pipeline_mode<synchronous>, transform_indices = @transform_3, window_bounds = array<i64: 128, 128>}, {pipeline_mode = #tpu.pipeline_mode<synchronous>, transform_indices = @transform_4, window_bounds = array<i64: 128, 128>}, {pipeline_mode = #tpu.pipeline_mode<synchronous>, transform_indices = @transform_5, window_bounds = array<i64: 8, 128>}, {transform_indices = @transform_6, window_bounds = array<i64: 8, 128>}]} {
    %c0 = arith.constant 0 : index
    %c0_0 = arith.constant 0 : index
    %0 = vector.load %arg6[%c0, %c0_0] : memref<8x128xf32, #tpu.memory_space<vmem>>, vector<8x128xf32>
    %1 = vector.extract_strided_slice %0 {offsets = [0, 0], sizes = [1, 128], strides = [1, 1]} : vector<8x128xf32> to vector<1x128xf32>
    %2 = vector.extract_strided_slice %0 {offsets = [1, 0], sizes = [1, 128], strides = [1, 1]} : vector<8x128xf32> to vector<1x128xf32>
    %3 = vector.extract_strided_slice %0 {offsets = [2, 0], sizes = [1, 128], strides = [1, 1]} : vector<8x128xf32> to vector<1x128xf32>
    %4 = vector.extract_strided_slice %0 {offsets = [3, 0], sizes = [1, 128], strides = [1, 1]} : vector<8x128xf32> to vector<1x128xf32>
    %5 = vector.extract_strided_slice %0 {offsets = [4, 0], sizes = [1, 128], strides = [1, 1]} : vector<8x128xf32> to vector<1x128xf32>
    %6 = vector.extract_strided_slice %0 {offsets = [5, 0], sizes = [1, 128], strides = [1, 1]} : vector<8x128xf32> to vector<1x128xf32>
    %7 = vector.extract_strided_slice %0 {offsets = [6, 0], sizes = [1, 128], strides = [1, 1]} : vector<8x128xf32> to vector<1x128xf32>
    %8 = vector.extract_strided_slice %0 {offsets = [7, 0], sizes = [1, 128], strides = [1, 1]} : vector<8x128xf32> to vector<1x128xf32>
    %c0_1 = arith.constant 0 : index
    %c0_2 = arith.constant 0 : index
    %9 = vector.load %arg1[%c0_1, %c0_2] : memref<8x16xbf16, #tpu.memory_space<vmem>>, vector<8x16xbf16>
    %c0_3 = arith.constant 0 : index
    %c0_4 = arith.constant 0 : index
    %10 = vector.load %arg2[%c0_3, %c0_4] : memref<16x128xbf16, #tpu.memory_space<vmem>>, vector<16x128xbf16>
    %cst = arith.constant dense<0.000000e+00> : vector<8x128xf32>
    %11 = tpu.matmul %9, %10, %cst {dimension_numbers = #tpu.dot_dimension_numbers<[1], [0], [0], [1], [0, 0, 1, 1], [], []>} : vector<8x16xbf16>, vector<16x128xbf16>, vector<8x128xf32> -> vector<8x128xf32>
    %12 = vector.broadcast %1 : vector<1x128xf32> to vector<8x128xf32>
    %13 = arith.addf %11, %12 : vector<8x128xf32>
    %cst_5 = arith.constant 0.000000e+00 : f32
    %14 = vector.broadcast %cst_5 : f32 to vector<8x128xf32>
    %15 = arith.cmpf ogt, %13, %14 : vector<8x128xf32>
    %cst_6 = arith.constant 1.000000e-01 : f32
    %16 = vector.broadcast %cst_6 : f32 to vector<8x128xf32>
    %17 = arith.mulf %16, %13 : vector<8x128xf32>
    %18 = arith.select %15, %13, %17 : vector<8x128xi1>, vector<8x128xf32>
    %cst_7 = arith.constant dense<0.000000e+00> : vector<8xf32>
    %19 = vector.multi_reduction <add>, %18, %cst_7 [1] : vector<8x128xf32> to vector<8xf32>
    %20 = vector.shape_cast %19 : vector<8xf32> to vector<8x1xf32>
    %cst_8 = arith.constant 1.280000e+02 : f32
    %21 = vector.broadcast %cst_8 : f32 to vector<8x1xf32>
    %22 = arith.divf %20, %21 : vector<8x1xf32>
    %23 = arith.mulf %18, %18 : vector<8x128xf32>
    %cst_9 = arith.constant dense<0.000000e+00> : vector<8xf32>
    %24 = vector.multi_reduction <add>, %23, %cst_9 [1] : vector<8x128xf32> to vector<8xf32>
    %25 = vector.shape_cast %24 : vector<8xf32> to vector<8x1xf32>
    %cst_10 = arith.constant 1.280000e+02 : f32
    %26 = vector.broadcast %cst_10 : f32 to vector<8x1xf32>
    %27 = arith.divf %25, %26 : vector<8x1xf32>
    %28 = arith.mulf %22, %22 : vector<8x1xf32>
    %29 = arith.subf %27, %28 : vector<8x1xf32>
    %cst_11 = arith.constant 0.000000e+00 : f32
    %30 = vector.broadcast %cst_11 : f32 to vector<8x1xf32>
    %31 = arith.maximumf %29, %30 : vector<8x1xf32>
    %32 = vector.broadcast %22 : vector<8x1xf32> to vector<8x128xf32>
    %33 = arith.subf %18, %32 : vector<8x128xf32>
    %cst_12 = arith.constant 9.99999974E-6 : f32
    %34 = vector.broadcast %cst_12 : f32 to vector<8x1xf32>
    %35 = arith.addf %31, %34 : vector<8x1xf32>
    %36 = math.rsqrt %35 : vector<8x1xf32>
    %37 = vector.broadcast %36 : vector<8x1xf32> to vector<8x128xf32>
    %38 = arith.mulf %33, %37 : vector<8x128xf32>
    %39 = vector.broadcast %2 : vector<1x128xf32> to vector<8x128xf32>
    %40 = arith.mulf %38, %39 : vector<8x128xf32>
    %41 = vector.broadcast %3 : vector<1x128xf32> to vector<8x128xf32>
    %42 = arith.addf %40, %41 : vector<8x128xf32>
    %43 = arith.truncf %42 : vector<8x128xf32> to vector<8x128xbf16>
    %c0_13 = arith.constant 0 : index
    %c0_14 = arith.constant 0 : index
    %44 = vector.load %arg3[%c0_13, %c0_14] : memref<128x128xbf16, #tpu.memory_space<vmem>>, vector<128x128xbf16>
    %cst_15 = arith.constant dense<0.000000e+00> : vector<8x128xf32>
    %45 = tpu.matmul %43, %44, %cst_15 {dimension_numbers = #tpu.dot_dimension_numbers<[1], [0], [0], [1], [0, 0, 1, 1], [], []>} : vector<8x128xbf16>, vector<128x128xbf16>, vector<8x128xf32> -> vector<8x128xf32>
    %46 = vector.broadcast %4 : vector<1x128xf32> to vector<8x128xf32>
    %47 = arith.addf %45, %46 : vector<8x128xf32>
    %cst_16 = arith.constant 0.000000e+00 : f32
    %48 = vector.broadcast %cst_16 : f32 to vector<8x128xf32>
    %49 = arith.cmpf ogt, %47, %48 : vector<8x128xf32>
    %cst_17 = arith.constant 1.000000e-01 : f32
    %50 = vector.broadcast %cst_17 : f32 to vector<8x128xf32>
    %51 = arith.mulf %50, %47 : vector<8x128xf32>
    %52 = arith.select %49, %47, %51 : vector<8x128xi1>, vector<8x128xf32>
    %cst_18 = arith.constant dense<0.000000e+00> : vector<8xf32>
    %53 = vector.multi_reduction <add>, %52, %cst_18 [1] : vector<8x128xf32> to vector<8xf32>
    %54 = vector.shape_cast %53 : vector<8xf32> to vector<8x1xf32>
    %cst_19 = arith.constant 1.280000e+02 : f32
    %55 = vector.broadcast %cst_19 : f32 to vector<8x1xf32>
    %56 = arith.divf %54, %55 : vector<8x1xf32>
    %57 = arith.mulf %52, %52 : vector<8x128xf32>
    %cst_20 = arith.constant dense<0.000000e+00> : vector<8xf32>
    %58 = vector.multi_reduction <add>, %57, %cst_20 [1] : vector<8x128xf32> to vector<8xf32>
    %59 = vector.shape_cast %58 : vector<8xf32> to vector<8x1xf32>
    %cst_21 = arith.constant 1.280000e+02 : f32
    %60 = vector.broadcast %cst_21 : f32 to vector<8x1xf32>
    %61 = arith.divf %59, %60 : vector<8x1xf32>
    %62 = arith.mulf %56, %56 : vector<8x1xf32>
    %63 = arith.subf %61, %62 : vector<8x1xf32>
    %cst_22 = arith.constant 0.000000e+00 : f32
    %64 = vector.broadcast %cst_22 : f32 to vector<8x1xf32>
    %65 = arith.maximumf %63, %64 : vector<8x1xf32>
    %66 = vector.broadcast %56 : vector<8x1xf32> to vector<8x128xf32>
    %67 = arith.subf %52, %66 : vector<8x128xf32>
    %cst_23 = arith.constant 9.99999974E-6 : f32
    %68 = vector.broadcast %cst_23 : f32 to vector<8x1xf32>
    %69 = arith.addf %65, %68 : vector<8x1xf32>
    %70 = math.rsqrt %69 : vector<8x1xf32>
    %71 = vector.broadcast %70 : vector<8x1xf32> to vector<8x128xf32>
    %72 = arith.mulf %67, %71 : vector<8x128xf32>
    %73 = vector.broadcast %5 : vector<1x128xf32> to vector<8x128xf32>
    %74 = arith.mulf %72, %73 : vector<8x128xf32>
    %75 = vector.broadcast %6 : vector<1x128xf32> to vector<8x128xf32>
    %76 = arith.addf %74, %75 : vector<8x128xf32>
    %77 = arith.truncf %76 : vector<8x128xf32> to vector<8x128xbf16>
    %c0_24 = arith.constant 0 : index
    %c0_25 = arith.constant 0 : index
    %78 = vector.load %arg4[%c0_24, %c0_25] : memref<128x128xbf16, #tpu.memory_space<vmem>>, vector<128x128xbf16>
    %cst_26 = arith.constant dense<0.000000e+00> : vector<8x128xf32>
    %79 = tpu.matmul %77, %78, %cst_26 {dimension_numbers = #tpu.dot_dimension_numbers<[1], [0], [0], [1], [0, 0, 1, 1], [], []>} : vector<8x128xbf16>, vector<128x128xbf16>, vector<8x128xf32> -> vector<8x128xf32>
    %80 = vector.broadcast %7 : vector<1x128xf32> to vector<8x128xf32>
    %81 = arith.addf %79, %80 : vector<8x128xf32>
    %cst_27 = arith.constant 0.000000e+00 : f32
    %82 = vector.broadcast %cst_27 : f32 to vector<8x128xf32>
    %83 = arith.cmpf ogt, %81, %82 : vector<8x128xf32>
    %cst_28 = arith.constant 1.000000e-01 : f32
    %84 = vector.broadcast %cst_28 : f32 to vector<8x128xf32>
    %85 = arith.mulf %84, %81 : vector<8x128xf32>
    %86 = arith.select %83, %81, %85 : vector<8x128xi1>, vector<8x128xf32>
    %87 = arith.truncf %86 : vector<8x128xf32> to vector<8x128xbf16>
    %c0_29 = arith.constant 0 : index
    %c0_30 = arith.constant 0 : index
    %88 = vector.load %arg5[%c0_29, %c0_30] : memref<128x128xbf16, #tpu.memory_space<vmem>>, vector<128x128xbf16>
    %cst_31 = arith.constant dense<0.000000e+00> : vector<8x128xf32>
    %89 = tpu.matmul %87, %88, %cst_31 {dimension_numbers = #tpu.dot_dimension_numbers<[1], [0], [0], [1], [0, 0, 1, 1], [], []>} : vector<8x128xbf16>, vector<128x128xbf16>, vector<8x128xf32> -> vector<8x128xf32>
    %90 = vector.broadcast %8 : vector<1x128xf32> to vector<8x128xf32>
    %91 = arith.addf %89, %90 : vector<8x128xf32>
    %92 = vector.extract_strided_slice %91 {offsets = [0, 127], sizes = [8, 1], strides = [1, 1]} : vector<8x128xf32> to vector<8x1xf32>
    %cst_32 = arith.constant dense<0.000000e+00> : vector<8xf32>
    %93 = vector.multi_reduction <add>, %91, %cst_32 [1] : vector<8x128xf32> to vector<8xf32>
    %94 = vector.shape_cast %93 : vector<8xf32> to vector<8x1xf32>
    %95 = arith.subf %94, %92 : vector<8x1xf32>
    %cst_33 = arith.constant 0.333333343 : f32
    %96 = vector.broadcast %cst_33 : f32 to vector<8x1xf32>
    %97 = arith.mulf %95, %96 : vector<8x1xf32>
    %98 = vector.broadcast %92 : vector<8x1xf32> to vector<8x128xf32>
    %99 = arith.addf %98, %91 : vector<8x128xf32>
    %100 = vector.broadcast %97 : vector<8x1xf32> to vector<8x128xf32>
    %101 = arith.subf %99, %100 : vector<8x128xf32>
    %c0_34 = arith.constant 0 : index
    %c0_35 = arith.constant 0 : index
    %102 = vector.load %arg7[%c0_34, %c0_35] : memref<8x128xf32, #tpu.memory_space<vmem>>, vector<8x128xf32>
    tpu.vector_store %arg7[%c0_34, %c0_35], %101 {strides = array<i32>} : memref<8x128xf32, #tpu.memory_space<vmem>>, vector<8x128xf32>,
    return
  }
  func.func @transform_0(%arg0: i32) -> (i32, i32) {
    %c0_i32 = arith.constant 0 : i32
    %c0_i32_0 = arith.constant 0 : i32
    return %arg0, %c0_i32 : i32, i32
  }
  func.func @transform_1(%arg0: i32) -> (i32, i32) {
    %c0_i32 = arith.constant 0 : i32
    %c0_i32_0 = arith.constant 0 : i32
    %c0_i32_1 = arith.constant 0 : i32
    return %c0_i32, %c0_i32_0 : i32, i32
  }
  func.func @transform_2(%arg0: i32) -> (i32, i32) {
    %c0_i32 = arith.constant 0 : i32
    %c0_i32_0 = arith.constant 0 : i32
    %c0_i32_1 = arith.constant 0 : i32
    return %c0_i32, %c0_i32_0 : i32, i32
  }
  func.func @transform_3(%arg0: i32) -> (i32, i32) {
    %c0_i32 = arith.constant 0 : i32
    %c0_i32_0 = arith.constant 0 : i32
    %c0_i32_1 = arith.constant 0 : i32
    return %c0_i32, %c0_i32_0 : i32, i32
  }
  func.func @transform_4(%arg0: i32) -> (i32, i32) {
    %c0_i32 = arith.constant 0 : i32
    %c0_i32_0 = arith.constant 0 : i32
    %c0_i32_1 = arith.constant 0 : i32
    return %c0_i32, %c0_i32_0 : i32, i32
  }
  func.func @transform_5(%arg0: i32) -> (i32, i32) {
    %c0_i32 = arith.constant 0 : i32
    %c0_i32_0 = arith.constant 0 : i32
    %c0_i32_1 = arith.constant 0 : i32
    return %c0_i32, %c0_i32_0 : i32, i32
  }
  func.func @transform_6(%arg0: i32) -> (i32, i32) {
    %c0_i32 = arith.constant 0 : i32
    %c0_i32_0 = arith.constant 0 : i32
    return %arg0, %c0_i32 : i32, i32
  }
}

</mosaic_0001>

<llo_original>
// kernel: tpu_custom_call.1
$region0: #{tpu_custom_call.1}
  #allocation0 [shape = 'u32[]', space=smem, size = 0x4, offset = 0x4, fixed_abs, tag = 'smem constant byte address 0x4 - core index']
  #allocation1 [shape = 'u32[144,128]{1,0:T(1,128)}', space=vmem, size = 0x12000, scoped, tag = 'internal scratch']
  %s0 = inlined_call_operand.hbm [shape: bf16[8,16], index: 0, kind: input, shape index: {}]
  %s1 = inlined_call_operand.hbm [shape: bf16[16,128], index: 1, kind: input, shape index: {}]
  %s2 = inlined_call_operand.hbm [shape: bf16[128,128], index: 2, kind: input, shape index: {}]
  %s3 = inlined_call_operand.hbm [shape: bf16[128,128], index: 3, kind: input, shape index: {}]
  %s4 = inlined_call_operand.hbm [shape: bf16[128,128], index: 4, kind: input, shape index: {}]
  %s5 = inlined_call_operand.vmem [shape: f32[8,128], index: 5, kind: input, shape index: {}]
  %s6 = inlined_call_operand.hbm [shape: f32[8,128], index: 6, kind: output, shape index: {}]
  %s7 = sld [smem:[#allocation0]]
  $region54: #{tpu_custom_call.1} parent=0
    _
  %s9 = ssub.s32 1, %s7
  %s10 = scalar_select 0, %s9, %s7
  $region1: #{tpu_custom_call.1} parent=0
    #allocation2 [shape = 'u8[2048]{0}', space=vmem, size = 0x800, scoped, tag = 'input window, operand 0, single buffered']
    #allocation3 [shape = 's32[1]{0}', space=sflag, size = 0x4, scoped, tag = 'scoped memory for tpu_custom_call.1']
    #allocation4 [shape = 's32[1]{0}', space=sflag, size = 0x4, scoped, tag = 'scoped memory for tpu_custom_call.1']
    #allocation5 [shape = 'u8[4096]{0}', space=vmem, size = 0x1000, scoped, tag = 'input window, operand 1, single buffered']
    #allocation6 [shape = 's32[1]{0}', space=sflag, size = 0x4, scoped, tag = 'scoped memory for tpu_custom_call.1']
    #allocation7 [shape = 'u8[32768]{0}', space=vmem, size = 0x8000, scoped, tag = 'input window, operand 2, single buffered']
    #allocation8 [shape = 'u8[32768]{0}', space=vmem, size = 0x8000, scoped, tag = 'input window, operand 3, single buffered']
    #allocation9 [shape = 's32[1]{0}', space=sflag, size = 0x4, scoped, tag = 'scoped memory for tpu_custom_call.1']
    #allocation10 [shape = 'u8[32768]{0}', space=vmem, size = 0x8000, scoped, tag = 'input window, operand 4, single buffered']
    #allocation11 [shape = 'u8[4096]{0}', space=vmem, size = 0x1000, scoped, tag = 'output window, operand 0, single buffered']
    %11 = vsyncpa [#allocation3], 0
    %12 = vsyncpa [#allocation6], 0
    %13 = vsyncpa [#allocation9], 0
    %14 = vsyncpa [#allocation4], 0
    // Predicated region
    $region2: #{tpu_custom_call.1} parent=1 // pred_check
      _
    $region3: #{tpu_custom_call.1} parent=1 // pred_check_branch
      %16 = sbr.rel (0) target = $region5
    $region4: #{tpu_custom_call.1} parent=1 // pred_region
      %s18 = ssub.s32 64, 64
      %19 = vsyncadd [#allocation3], %s18
      %s21 = sshll.u32 [#allocation2], 4
      %s22 = int_to_ptr.vmem [resolvable:$true] %s21
      %24 = dma.hbm_to_vmem [thread:$0]  %s0, 64, %s22, [#allocation3]
    $region5: #{tpu_custom_call.1} parent=1 // pred_fallthru
      _
    // Predicated region
    $region6: #{tpu_custom_call.1} parent=1 // pred_check
      _
    $region7: #{tpu_custom_call.1} parent=1 // pred_check_branch
      %26 = sbr.rel (0) target = $region9
    $region8: #{tpu_custom_call.1} parent=1 // pred_region
      %s28 = ssub.s32 128, 128
      %29 = vsyncadd [#allocation6], %s28
      %s30 = sshll.u32 [#allocation5], 4
      %s31 = int_to_ptr.vmem [resolvable:$true] %s30
      %36 = dma.hbm_to_vmem [thread:$0]  %s1, 128, %s31, [#allocation6], 64, 64, 4
    $region9: #{tpu_custom_call.1} parent=1 // pred_fallthru
      _
    // Predicated region
    $region10: #{tpu_custom_call.1} parent=1 // pred_check
      _
    $region11: #{tpu_custom_call.1} parent=1 // pred_check_branch
      %38 = sbr.rel (0) target = $region13
    $region12: #{tpu_custom_call.1} parent=1 // pred_region
      %s40 = ssub.s32 1024, 1024
      %41 = vsyncadd [#allocation6], %s40
      %s42 = sshll.u32 [#allocation7], 4
      %s43 = int_to_ptr.vmem [resolvable:$true] %s42
      %48 = dma.hbm_to_vmem [thread:$0]  %s2, 1024, %s43, [#allocation6], 64, 64, 4
    $region13: #{tpu_custom_call.1} parent=1 // pred_fallthru
      _
    // Predicated region
    $region14: #{tpu_custom_call.1} parent=1 // pred_check
      _
    $region15: #{tpu_custom_call.1} parent=1 // pred_check_branch
      %50 = sbr.rel (0) target = $region17
    $region16: #{tpu_custom_call.1} parent=1 // pred_region
      %s52 = ssub.s32 1024, 1024
      %53 = vsyncadd [#allocation9], %s52
      %s54 = sshll.u32 [#allocation8], 4
      %s55 = int_to_ptr.vmem [resolvable:$true] %s54
      %60 = dma.hbm_to_vmem [thread:$0]  %s3, 1024, %s55, [#allocation9], 64, 64, 4
    $region17: #{tpu_custom_call.1} parent=1 // pred_fallthru
      _
    // Predicated region
    $region18: #{tpu_custom_call.1} parent=1 // pred_check
      _
    $region19: #{tpu_custom_call.1} parent=1 // pred_check_branch
      %62 = sbr.rel (0) target = $region21
    $region20: #{tpu_custom_call.1} parent=1 // pred_region
      %s64 = ssub.s32 1024, 1024
      %65 = vsyncadd [#allocation9], %s64
      %s66 = sshll.u32 [#allocation10], 4
      %s67 = int_to_ptr.vmem [resolvable:$true] %s66
      %72 = dma.hbm_to_vmem [thread:$0]  %s4, 1024, %s67, [#allocation9], 64, 64, 4
    $region21: #{tpu_custom_call.1} parent=1 // pred_fallthru
      _
    // Predicated region
    $region22: #{tpu_custom_call.1} parent=1 // pred_check
      _
    $region23: #{tpu_custom_call.1} parent=1 // pred_check_branch
      %74 = sbr.rel (0) target = $region25
    $region24: #{tpu_custom_call.1} parent=1 // pred_region
      _
    $region25: #{tpu_custom_call.1} parent=1 // pred_fallthru
      _
    // Predicated region
    $region26: #{tpu_custom_call.1} parent=1 // pred_check
      _
    $region27: #{tpu_custom_call.1} parent=1 // pred_check_branch
      %76 = sbr.rel (0) target = $region29
    $region28: #{tpu_custom_call.1} parent=1 // pred_region
      %77 = dma.done [#allocation3], 64
    $region29: #{tpu_custom_call.1} parent=1 // pred_fallthru
      _
    // Predicated region
    $region30: #{tpu_custom_call.1} parent=1 // pred_check
      _
    $region31: #{tpu_custom_call.1} parent=1 // pred_check_branch
      %79 = sbr.rel (0) target = $region33
    $region32: #{tpu_custom_call.1} parent=1 // pred_region
      %80 = dma.done [#allocation6], 128
    $region33: #{tpu_custom_call.1} parent=1 // pred_fallthru
      _
    // Predicated region
    $region34: #{tpu_custom_call.1} parent=1 // pred_check
      _
    $region35: #{tpu_custom_call.1} parent=1 // pred_check_branch
      %82 = sbr.rel (0) target = $region37
    $region36: #{tpu_custom_call.1} parent=1 // pred_region
      %83 = dma.done [#allocation6], 1024
    $region37: #{tpu_custom_call.1} parent=1 // pred_fallthru
      _
    // Predicated region
    $region38: #{tpu_custom_call.1} parent=1 // pred_check
      _
    $region39: #{tpu_custom_call.1} parent=1 // pred_check_branch
      %85 = sbr.rel (0) target = $region41
    $region40: #{tpu_custom_call.1} parent=1 // pred_region
      %86 = dma.done [#allocation9], 1024
    $region41: #{tpu_custom_call.1} parent=1 // pred_fallthru
      _
    // Predicated region
    $region42: #{tpu_custom_call.1} parent=1 // pred_check
      _
    $region43: #{tpu_custom_call.1} parent=1 // pred_check_branch
      %88 = sbr.rel (0) target = $region45
    $region44: #{tpu_custom_call.1} parent=1 // pred_region
      %89 = dma.done [#allocation9], 1024
    $region45: #{tpu_custom_call.1} parent=1 // pred_fallthru
      _
    %v91 = vld [vmem:[%s5] sm:$0xff]
    %v92 = vld [vmem:[#allocation2] sm:$0xf]
    %v93 = vld [vmem:[#allocation5] sm:$0xf]
    %v94 = vld [vmem:[#allocation5 + $0x4] sm:$0xf]
    %v95 = vlaneseq
    %v96 = vshrl.u32 %v95, 7
    %v97 = vsub.s32 0, %v96
    %v98 = vrot.slane %v91, %v97
    %v101 = vunpack.c.l.b16 %v93
    %v102 = vunpack.c.l.b16 %v94
    %v103 = vpack.c.b16 %v102, %v101
    %vm105 = vcmask 130048
    %v107 = vsel %vm105, %v92, 0
    %109 = vmatprep.subr.bf16.mxu0 0
    %110 = vmatpush1.bf16.msra.mxu0 %v103
    %111 = vmatprep.subr.bf16.mxu0 0
    %112 = vmatpush1.bf16.msra.mxu0 0
    %113 = vmatprep.subr.bf16.mxu0 0
    %114 = vmatpush1.bf16.msra.mxu0 0
    %115 = vmatprep.subr.bf16.mxu0 0
    %116 = vmatpush1.bf16.msra.mxu0 0
    %117 = vmatprep.subr.bf16.mxu0 0
    %118 = vmatpush1.bf16.msra.mxu0 0
    %119 = vmatprep.subr.bf16.mxu0 0
    %120 = vmatpush1.bf16.msra.mxu0 0
    %121 = vmatprep.subr.bf16.mxu0 0
    %122 = vmatpush1.bf16.msra.mxu0 0
    %123 = vmatprep.subr.bf16.mxu0 0
    %124 = vmatpush1.bf16.msra.mxu0 0
    %125 = vmatprep.subr.bf16.mxu0 0
    %126 = vmatpush1.bf16.msra.mxu0 0
    %127 = vmatprep.subr.bf16.mxu0 0
    %128 = vmatpush1.bf16.msra.mxu0 0
    %129 = vmatprep.subr.bf16.mxu0 0
    %130 = vmatpush1.bf16.msra.mxu0 0
    %131 = vmatprep.subr.bf16.mxu0 0
    %132 = vmatpush1.bf16.msra.mxu0 0
    %133 = vmatprep.subr.bf16.mxu0 0
    %134 = vmatpush1.bf16.msra.mxu0 0
    %135 = vmatprep.subr.bf16.mxu0 0
    %136 = vmatpush1.bf16.msra.mxu0 0
    %137 = vmatprep.subr.bf16.mxu0 0
    %138 = vmatpush1.bf16.msra.mxu0 0
    %139 = vmatprep.subr.bf16.mxu0 0
    %140 = vmatpush1.bf16.msra.mxu0 0
    %141 = vmatprep.mubr.bf16.mxu0 0
    %142 = vmatmul.mubr.bf16.gmra.mrb[0].mxu0 %v107
    %v143 = vpop.f32.mrb[0].mxu0
    %v144 = vadd.f32 %v98, %v143
    %v145 = vpop.f32.mrb[0].mxu0
    %v146 = vpop.f32.mrb[0].mxu0
    %v147 = vpop.f32.mrb[0].mxu0
    %148 = vdwg.mxu0
    %vm149 = vcmp.gt.f32.partialorder %v144, 0.0
    %v150 = vmul.f32 %v144, 0.1
    %v151 = vsel %vm149, %v144, %v150
    %152 = vadd.xlane.f32.xlu0 %v151
    %v153 = vpop.xlane.xlu0 %152
    %v154 = vrcp.pop 128.0
    %v155 = vmul.f32 %v153, %v154
    %v156 = vmul.f32 %v151, %v151
    %157 = vadd.xlane.f32.xlu0 %v156
    %v158 = vpop.xlane.xlu0 %157
    %v159 = vmul.f32 %v158, %v154
    %v160 = vmul.f32 %v155, %v155
    %v161 = vsub.f32 %v159, %v160
    %v162 = vmax.f32 %v161, 0.0
    %v163 = vsub.f32 %v151, %v155
    %v164 = vadd.f32 %v162, 1e-05
    %v165 = vrsqrt.pop %v164
    %v166 = vmul.f32 %v163, %v165
    %v167 = vlaneseq
    %v168 = vshrl.u32 %v167, 7
    %v169 = vsub.s32 1, %v168
    %v170 = vrot.slane %v91, %v169
    %v171 = vmul.f32 %v166, %v170
    %v172 = vlaneseq
    %v173 = vshrl.u32 %v172, 7
    %v174 = vsub.s32 2, %v173
    %v175 = vrot.slane %v91, %v174
    %v176 = vadd.f32 %v171, %v175
    %v177 = vpack.c.bf16 %v176, %v176
    %v178 = vld [vmem:[#allocation7] sm:$0xf]
    %v179 = vld [vmem:[#allocation7 + $0x4] sm:$0xf]
    %v180 = vld [vmem:[#allocation7 + $0x8] sm:$0xf]
    %v181 = vld [vmem:[#allocation7 + $0xc] sm:$0xf]
    %v182 = vld [vmem:[#allocation7 + $0x10] sm:$0xf]
    %v183 = vld [vmem:[#allocation7 + $0x14] sm:$0xf]
    %v184 = vld [vmem:[#allocation7 + $0x18] sm:$0xf]
    %v185 = vld [vmem:[#allocation7 + $0x1c] sm:$0xf]
    %v186 = vld [vmem:[#allocation7 + $0x20] sm:$0xf]
    %v187 = vld [vmem:[#allocation7 + $0x24] sm:$0xf]
    %v188 = vld [vmem:[#allocation7 + $0x28] sm:$0xf]
    %v189 = vld [vmem:[#allocation7 + $0x2c] sm:$0xf]
    %v190 = vld [vmem:[#allocation7 + $0x30] sm:$0xf]
    %v191 = vld [vmem:[#allocation7 + $0x34] sm:$0xf]
    %v192 = vld [vmem:[#allocation7 + $0x38] sm:$0xf]
    %v193 = vld [vmem:[#allocation7 + $0x3c] sm:$0xf]
    %v194 = vlaneseq
    %v195 = vshrl.u32 %v194, 7
    %v196 = vsub.s32 3, %v195
    %v197 = vrot.slane %v91, %v196
    %v214 = vunpack.c.l.b16 %v178
    %v215 = vunpack.c.l.b16 %v179
    %v216 = vunpack.c.l.b16 %v180
    %v217 = vunpack.c.l.b16 %v181
    %v218 = vunpack.c.l.b16 %v182
    %v219 = vunpack.c.l.b16 %v183
    %v220 = vunpack.c.l.b16 %v184
    %v221 = vunpack.c.l.b16 %v185
    %v222 = vunpack.c.l.b16 %v186
    %v223 = vunpack.c.l.b16 %v187
    %v224 = vunpack.c.l.b16 %v188
    %v225 = vunpack.c.l.b16 %v189
    %v226 = vunpack.c.l.b16 %v190
    %v227 = vunpack.c.l.b16 %v191
    %v228 = vunpack.c.l.b16 %v192
    %v229 = vunpack.c.l.b16 %v193
    %v230 = vpack.c.b16 %v215, %v214
    %v231 = vpack.c.b16 %v217, %v216
    %v232 = vpack.c.b16 %v219, %v218
    %v233 = vpack.c.b16 %v221, %v220
    %v234 = vpack.c.b16 %v223, %v222
    %v235 = vpack.c.b16 %v225, %v224
    %v236 = vpack.c.b16 %v227, %v226
    %v237 = vpack.c.b16 %v229, %v228
    %246 = vmatprep.subr.bf16.mxu0 0
    %247 = vmatpush1.bf16.msra.mxu0 %v230
    %248 = vmatprep.subr.bf16.mxu0 0
    %249 = vmatpush1.bf16.msra.mxu0 %v231
    %250 = vmatprep.subr.bf16.mxu0 0
    %251 = vmatpush1.bf16.msra.mxu0 %v232
    %252 = vmatprep.subr.bf16.mxu0 0
    %253 = vmatpush1.bf16.msra.mxu0 %v233
    %254 = vmatprep.subr.bf16.mxu0 0
    %255 = vmatpush1.bf16.msra.mxu0 %v234
    %256 = vmatprep.subr.bf16.mxu0 0
    %257 = vmatpush1.bf16.msra.mxu0 %v235
    %258 = vmatprep.subr.bf16.mxu0 0
    %259 = vmatpush1.bf16.msra.mxu0 %v236
    %260 = vmatprep.subr.bf16.mxu0 0
    %261 = vmatpush1.bf16.msra.mxu0 %v237
    %262 = vmatprep.subr.bf16.mxu0 0
    %263 = vmatpush1.bf16.msra.mxu0 0
    %264 = vmatprep.subr.bf16.mxu0 0
    %265 = vmatpush1.bf16.msra.mxu0 0
    %266 = vmatprep.subr.bf16.mxu0 0
    %267 = vmatpush1.bf16.msra.mxu0 0
    %268 = vmatprep.subr.bf16.mxu0 0
    %269 = vmatpush1.bf16.msra.mxu0 0
    %270 = vmatprep.subr.bf16.mxu0 0
    %271 = vmatpush1.bf16.msra.mxu0 0
    %272 = vmatprep.subr.bf16.mxu0 0
    %273 = vmatpush1.bf16.msra.mxu0 0
    %274 = vmatprep.subr.bf16.mxu0 0
    %275 = vmatpush1.bf16.msra.mxu0 0
    %276 = vmatprep.subr.bf16.mxu0 0
    %277 = vmatpush1.bf16.msra.mxu0 0
    %278 = vmatprep.mubr.bf16.mxu0 0
    %279 = vmatmul.mubr.bf16.gmra.mrb[0].mxu0 %v177
    %v280 = vpop.f32.mrb[0].mxu0
    %v281 = vadd.f32 %v197, %v280
    %v282 = vpop.f32.mrb[0].mxu0
    %v283 = vpop.f32.mrb[0].mxu0
    %v284 = vpop.f32.mrb[0].mxu0
    %285 = vdwg.mxu0
    %vm286 = vcmp.gt.f32.partialorder %v281, 0.0
    %v287 = vmul.f32 %v281, 0.1
    %v288 = vsel %vm286, %v281, %v287
    %289 = vadd.xlane.f32.xlu0 %v288
    %v290 = vpop.xlane.xlu0 %289
    %v291 = vmul.f32 %v290, %v154
    %v292 = vmul.f32 %v288, %v288
    %293 = vadd.xlane.f32.xlu0 %v292
    %v294 = vpop.xlane.xlu0 %293
    %v295 = vmul.f32 %v294, %v154
    %v296 = vmul.f32 %v291, %v291
    %v297 = vsub.f32 %v295, %v296
    %v298 = vmax.f32 %v297, 0.0
    %v299 = vsub.f32 %v288, %v291
    %v300 = vadd.f32 %v298, 1e-05
    %v301 = vrsqrt.pop %v300
    %v302 = vmul.f32 %v299, %v301
    %v303 = vlaneseq
    %v304 = vshrl.u32 %v303, 7
    %v305 = vsub.s32 4, %v304
    %v306 = vrot.slane %v91, %v305
    %v307 = vmul.f32 %v302, %v306
    %v308 = vlaneseq
    %v309 = vshrl.u32 %v308, 7
    %v310 = vsub.s32 5, %v309
    %v311 = vrot.slane %v91, %v310
    %v312 = vadd.f32 %v307, %v311
    %v313 = vpack.c.bf16 %v312, %v312
    %v314 = vld [vmem:[#allocation8] sm:$0xf]
    %v315 = vld [vmem:[#allocation8 + $0x4] sm:$0xf]
    %v316 = vld [vmem:[#allocation8 + $0x8] sm:$0xf]
    %v317 = vld [vmem:[#allocation8 + $0xc] sm:$0xf]
    %v318 = vld [vmem:[#allocation8 + $0x10] sm:$0xf]
    %v319 = vld [vmem:[#allocation8 + $0x14] sm:$0xf]
    %v320 = vld [vmem:[#allocation8 + $0x18] sm:$0xf]
    %v321 = vld [vmem:[#allocation8 + $0x1c] sm:$0xf]
    %v322 = vld [vmem:[#allocation8 + $0x20] sm:$0xf]
    %v323 = vld [vmem:[#allocation8 + $0x24] sm:$0xf]
    %v324 = vld [vmem:[#allocation8 + $0x28] sm:$0xf]
    %v325 = vld [vmem:[#allocation8 + $0x2c] sm:$0xf]
    %v326 = vld [vmem:[#allocation8 + $0x30] sm:$0xf]
    %v327 = vld [vmem:[#allocation8 + $0x34] sm:$0xf]
    %v328 = vld [vmem:[#allocation8 + $0x38] sm:$0xf]
    %v329 = vld [vmem:[#allocation8 + $0x3c] sm:$0xf]
    %v330 = vlaneseq
    %v331 = vshrl.u32 %v330, 7
    %v332 = vsub.s32 6, %v331
    %v333 = vrot.slane %v91, %v332
    %v350 = vunpack.c.l.b16 %v314
    %v351 = vunpack.c.l.b16 %v315
    %v352 = vunpack.c.l.b16 %v316
    %v353 = vunpack.c.l.b16 %v317
    %v354 = vunpack.c.l.b16 %v318
    %v355 = vunpack.c.l.b16 %v319
    %v356 = vunpack.c.l.b16 %v320
    %v357 = vunpack.c.l.b16 %v321
    %v358 = vunpack.c.l.b16 %v322
    %v359 = vunpack.c.l.b16 %v323
    %v360 = vunpack.c.l.b16 %v324
    %v361 = vunpack.c.l.b16 %v325
    %v362 = vunpack.c.l.b16 %v326
    %v363 = vunpack.c.l.b16 %v327
    %v364 = vunpack.c.l.b16 %v328
    %v365 = vunpack.c.l.b16 %v329
    %v366 = vpack.c.b16 %v351, %v350
    %v367 = vpack.c.b16 %v353, %v352
    %v368 = vpack.c.b16 %v355, %v354
    %v369 = vpack.c.b16 %v357, %v356
    %v370 = vpack.c.b16 %v359, %v358
    %v371 = vpack.c.b16 %v361, %v360
    %v372 = vpack.c.b16 %v363, %v362
    %v373 = vpack.c.b16 %v365, %v364
    %382 = vmatprep.subr.bf16.mxu0 0
    %383 = vmatpush1.bf16.msra.mxu0 %v366
    %384 = vmatprep.subr.bf16.mxu0 0
    %385 = vmatpush1.bf16.msra.mxu0 %v367
    %386 = vmatprep.subr.bf16.mxu0 0
    %387 = vmatpush1.bf16.msra.mxu0 %v368
    %388 = vmatprep.subr.bf16.mxu0 0
    %389 = vmatpush1.bf16.msra.mxu0 %v369
    %390 = vmatprep.subr.bf16.mxu0 0
    %391 = vmatpush1.bf16.msra.mxu0 %v370
    %392 = vmatprep.subr.bf16.mxu0 0
    %393 = vmatpush1.bf16.msra.mxu0 %v371
    %394 = vmatprep.subr.bf16.mxu0 0
    %395 = vmatpush1.bf16.msra.mxu0 %v372
    %396 = vmatprep.subr.bf16.mxu0 0
    %397 = vmatpush1.bf16.msra.mxu0 %v373
    %398 = vmatprep.subr.bf16.mxu0 0
    %399 = vmatpush1.bf16.msra.mxu0 0
    %400 = vmatprep.subr.bf16.mxu0 0
    %401 = vmatpush1.bf16.msra.mxu0 0
    %402 = vmatprep.subr.bf16.mxu0 0
    %403 = vmatpush1.bf16.msra.mxu0 0
    %404 = vmatprep.subr.bf16.mxu0 0
    %405 = vmatpush1.bf16.msra.mxu0 0
    %406 = vmatprep.subr.bf16.mxu0 0
    %407 = vmatpush1.bf16.msra.mxu0 0
    %408 = vmatprep.subr.bf16.mxu0 0
    %409 = vmatpush1.bf16.msra.mxu0 0
    %410 = vmatprep.subr.bf16.mxu0 0
    %411 = vmatpush1.bf16.msra.mxu0 0
    %412 = vmatprep.subr.bf16.mxu0 0
    %413 = vmatpush1.bf16.msra.mxu0 0
    %414 = vmatprep.mubr.bf16.mxu0 0
    %415 = vmatmul.mubr.bf16.gmra.mrb[0].mxu0 %v313
    %v416 = vpop.f32.mrb[0].mxu0
    %v417 = vadd.f32 %v333, %v416
    %v418 = vpop.f32.mrb[0].mxu0
    %v419 = vpop.f32.mrb[0].mxu0
    %v420 = vpop.f32.mrb[0].mxu0
    %421 = vdwg.mxu0
    %vm422 = vcmp.gt.f32.partialorder %v417, 0.0
    %v423 = vmul.f32 %v417, 0.1
    %v424 = vsel %vm422, %v417, %v423
    %v425 = vpack.c.bf16 %v424, %v424
    %v426 = vld [vmem:[#allocation10] sm:$0xf]
    %v427 = vld [vmem:[#allocation10 + $0x4] sm:$0xf]
    %v428 = vld [vmem:[#allocation10 + $0x8] sm:$0xf]
    %v429 = vld [vmem:[#allocation10 + $0xc] sm:$0xf]
    %v430 = vld [vmem:[#allocation10 + $0x10] sm:$0xf]
    %v431 = vld [vmem:[#allocation10 + $0x14] sm:$0xf]
    %v432 = vld [vmem:[#allocation10 + $0x18] sm:$0xf]
    %v433 = vld [vmem:[#allocation10 + $0x1c] sm:$0xf]
    %v434 = vld [vmem:[#allocation10 + $0x20] sm:$0xf]
    %v435 = vld [vmem:[#allocation10 + $0x24] sm:$0xf]
    %v436 = vld [vmem:[#allocation10 + $0x28] sm:$0xf]
    %v437 = vld [vmem:[#allocation10 + $0x2c] sm:$0xf]
    %v438 = vld [vmem:[#allocation10 + $0x30] sm:$0xf]
    %v439 = vld [vmem:[#allocation10 + $0x34] sm:$0xf]
    %v440 = vld [vmem:[#allocation10 + $0x38] sm:$0xf]
    %v441 = vld [vmem:[#allocation10 + $0x3c] sm:$0xf]
    %v442 = vlaneseq
    %v443 = vshrl.u32 %v442, 7
    %v444 = vsub.s32 7, %v443
    %v445 = vrot.slane %v91, %v444
    %v462 = vunpack.c.l.b16 %v426
    %v463 = vunpack.c.l.b16 %v427
    %v464 = vunpack.c.l.b16 %v428
    %v465 = vunpack.c.l.b16 %v429
    %v466 = vunpack.c.l.b16 %v430
    %v467 = vunpack.c.l.b16 %v431
    %v468 = vunpack.c.l.b16 %v432
    %v469 = vunpack.c.l.b16 %v433
    %v470 = vunpack.c.l.b16 %v434
    %v471 = vunpack.c.l.b16 %v435
    %v472 = vunpack.c.l.b16 %v436
    %v473 = vunpack.c.l.b16 %v437
    %v474 = vunpack.c.l.b16 %v438
    %v475 = vunpack.c.l.b16 %v439
    %v476 = vunpack.c.l.b16 %v440
    %v477 = vunpack.c.l.b16 %v441
    %v478 = vpack.c.b16 %v463, %v462
    %v479 = vpack.c.b16 %v465, %v464
    %v480 = vpack.c.b16 %v467, %v466
    %v481 = vpack.c.b16 %v469, %v468
    %v482 = vpack.c.b16 %v471, %v470
    %v483 = vpack.c.b16 %v473, %v472
    %v484 = vpack.c.b16 %v475, %v474
    %v485 = vpack.c.b16 %v477, %v476
    %494 = vmatprep.subr.bf16.mxu0 0
    %495 = vmatpush1.bf16.msra.mxu0 %v478
    %496 = vmatprep.subr.bf16.mxu0 0
    %497 = vmatpush1.bf16.msra.mxu0 %v479
    %498 = vmatprep.subr.bf16.mxu0 0
    %499 = vmatpush1.bf16.msra.mxu0 %v480
    %500 = vmatprep.subr.bf16.mxu0 0
    %501 = vmatpush1.bf16.msra.mxu0 %v481
    %502 = vmatprep.subr.bf16.mxu0 0
    %503 = vmatpush1.bf16.msra.mxu0 %v482
    %504 = vmatprep.subr.bf16.mxu0 0
    %505 = vmatpush1.bf16.msra.mxu0 %v483
    %506 = vmatprep.subr.bf16.mxu0 0
    %507 = vmatpush1.bf16.msra.mxu0 %v484
    %508 = vmatprep.subr.bf16.mxu0 0
    %509 = vmatpush1.bf16.msra.mxu0 %v485
    %510 = vmatprep.subr.bf16.mxu0 0
    %511 = vmatpush1.bf16.msra.mxu0 0
    %512 = vmatprep.subr.bf16.mxu0 0
    %513 = vmatpush1.bf16.msra.mxu0 0
    %514 = vmatprep.subr.bf16.mxu0 0
    %515 = vmatpush1.bf16.msra.mxu0 0
    %516 = vmatprep.subr.bf16.mxu0 0
    %517 = vmatpush1.bf16.msra.mxu0 0
    %518 = vmatprep.subr.bf16.mxu0 0
    %519 = vmatpush1.bf16.msra.mxu0 0
    %520 = vmatprep.subr.bf16.mxu0 0
    %521 = vmatpush1.bf16.msra.mxu0 0
    %522 = vmatprep.subr.bf16.mxu0 0
    %523 = vmatpush1.bf16.msra.mxu0 0
    %524 = vmatprep.subr.bf16.mxu0 0
    %525 = vmatpush1.bf16.msra.mxu0 0
    %526 = vmatprep.mubr.bf16.mxu0 0
    %527 = vmatmul.mubr.bf16.gmra.mrb[0].mxu0 %v425
    %v528 = vpop.f32.mrb[0].mxu0
    %v529 = vadd.f32 %v445, %v528
    %v530 = vpop.f32.mrb[0].mxu0
    %v531 = vpop.f32.mrb[0].mxu0
    %v532 = vpop.f32.mrb[0].mxu0
    %533 = vdwg.mxu0
    %534 = vadd.xlane.f32.xlu0 %v529
    %v535 = vpop.xlane.xlu0 %534
    %v536 = vsub.f32 %v535, %v529
    %v537 = vmul.f32 %v536, 0.33333334
    %539 = vset.pattern.permute.xlu0 127
    %540 = vperm.xlu0 %539, %v529
    %v541 = vpop.permute.xlu0 %540
    %v543 = vadd.f32 %v541, %v529
    %545 = vset.pattern.permute.xlu0 127
    %546 = vperm.xlu0 %545, %v537
    %v547 = vpop.permute.xlu0 %546
    %v549 = vsub.f32 %v543, %v547
    %550 = vst [vmem:[#allocation11] sm:$0xff] %v549
    // Predicated region
    $region46: #{tpu_custom_call.1} parent=1 // pred_check
      _
    $region47: #{tpu_custom_call.1} parent=1 // pred_check_branch
      %552 = sbr.rel (0) target = $region49
    $region48: #{tpu_custom_call.1} parent=1 // pred_region
      %s554 = ssub.s32 128, 128
      %555 = vsyncadd [#allocation4], %s554
      %s557 = sshll.u32 [#allocation11], 4
      %s558 = int_to_ptr.vmem [resolvable:$true] %s557
      %560 = dma.vmem_to_hbm [thread:$0]  %s558, 128, %s6, [#allocation4]
    $region49: #{tpu_custom_call.1} parent=1 // pred_fallthru
      _
    // Predicated region
    $region50: #{tpu_custom_call.1} parent=1 // pred_check
      _
    $region51: #{tpu_custom_call.1} parent=1 // pred_check_branch
      %562 = sbr.rel (0) target = $region53
    $region52: #{tpu_custom_call.1} parent=1 // pred_region
      %563 = dma.done [#allocation4], 128
    $region53: #{tpu_custom_call.1} parent=1 // pred_fallthru
      _
    %564 = vsyncpa [#allocation3], 1
    %565 = vsyncpa [#allocation6], 1
    %566 = vsyncpa [#allocation9], 1
    %567 = vsyncpa [#allocation4], 1

</llo_original>
